<compile_context>
chip_gen: v5e
topology: v5e:2x2
jax: 0.10.0
libtpu: 0.0.40
codegen_flags: <defaults>
</compile_context>

<pallas_src>
import numpy as np
import jax
import jax.numpy as jnp
from jax.experimental import pallas as pl
from jax.experimental.pallas import tpu as pltpu


# ---------------------------------------------------------------------------
# Fused encoder kernel: 3x (conv3x3 stride2 pad1 + ReLU), all in one body.
# ---------------------------------------------------------------------------
def _encoder_fused_kernel(x_ref, *refs):
    """refs = (hsel1, m1, b1, hsel2, m2, b2, hsel3, m3, b3, out_ref)."""
    o_ref = refs[-1]
    p_refs = refs[:-1]

    def conv3x3_s2_relu(a, hs_ref, m_ref, bt_ref):
        # a: (H, W*Cin) f32 -> (Ho, Wo*Cout) f32
        acc = jnp.dot(
            jnp.dot(hs_ref[0], a, preferred_element_type=jnp.float32),
            m_ref[0], preferred_element_type=jnp.float32)
        for kh in range(1, 3):
            rows = jnp.dot(hs_ref[kh], a, preferred_element_type=jnp.float32)
            acc = acc + jnp.dot(rows, m_ref[kh],
                                preferred_element_type=jnp.float32)
        return jnp.maximum(acc + bt_ref[...], 0.0)

    a = x_ref[0].astype(jnp.float32)          # (H, W*Cin) of the current image
    for i in range(0, len(p_refs), 3):
        a = conv3x3_s2_relu(a, p_refs[i], p_refs[i + 1], p_refs[i + 2])
    o_ref[0] = a.astype(o_ref.dtype)


# ---------------------------------------------------------------------------
# One-time weight packing: fold stride-2 / padding / kw-taps into matrices.
# ---------------------------------------------------------------------------
def prepare_encoder_params(params, input_hw):
    H, W = input_hw
    prepared = []
    for w_oihw, bias in params:
        cout, cin, kh_sz, kw_sz = w_oihw.shape
        assert (kh_sz, kw_sz) == (3, 3) and H % 2 == 0 and W % 2 == 0
        ho, wo = H // 2, W // 2
        hwio = jnp.transpose(w_oihw, (2, 3, 1, 0))      # (KH, KW, Cin, Cout)

        # hsel[kh, ho, r] = 1 iff r == 2*ho + kh - 1 (in-range): folds the
        # stride-2 row gather and the zero padding of rows.
        hsel = np.zeros((3, ho, H), np.float32)
        for kh in range(3):
            for o in range(ho):
                r = 2 * o + kh - 1
                if 0 <= r < H:
                    hsel[kh, o, r] = 1.0

        # Width placement one-hots: T[kw, w, wo] = 1 iff w == 2*wo + kw - 1.
        t = np.zeros((3, W, wo), np.float32)
        for kw in range(3):
            for o in range(wo):
                c = 2 * o + kw - 1
                if 0 <= c < W:
                    t[kw, c, o] = 1.0

        # M[kh, w*Cin+ci, wo*Cout+co] = W[kh, (w+1)-2*wo, ci, co] (banded).
        m = jnp.einsum("kwv,hkco->hwcvo", jnp.asarray(t), hwio,
                       precision=jax.lax.Precision.HIGHEST)
        m = m.reshape(3, W * cin, wo * cout)

        prepared.append((jnp.asarray(hsel), m, bias))
        H, W = ho, wo
    return prepared


# ---------------------------------------------------------------------------
# Forward pass: NCHW in / NCHW out (PyTorch convention).
# ---------------------------------------------------------------------------
def encoder_forward(x_nchw, prepared):
    N, C, H, W = x_nchw.shape
    x2d = jnp.transpose(x_nchw, (0, 2, 3, 1)).reshape(N, H, W * C)

    args = [x2d]
    in_specs = [pl.BlockSpec((1, H, W * C), lambda b: (b, 0, 0))]

    flops = 0
    bytes_accessed = x2d.size * 4
    for hsel, m, bias in prepared:
        cout = bias.shape[0]
        wo_cout = m.shape[2]
        wo = wo_cout // cout
        b_tiled = jnp.tile(bias, wo).reshape(1, wo_cout)

        args += [hsel, m, b_tiled]
        in_specs += [
            pl.BlockSpec(hsel.shape, lambda b: (0, 0, 0)),   # grid-resident
            pl.BlockSpec(m.shape, lambda b: (0, 0, 0)),      # grid-resident
            pl.BlockSpec((1, wo_cout), lambda b: (0, 0)),    # grid-resident
        ]
        ho, h_in = hsel.shape[1], hsel.shape[2]
        k1, k2 = m.shape[1], m.shape[2]
        flops += N * 3 * 2 * (ho * h_in * k1 + ho * k1 * k2)
        bytes_accessed += (hsel.size + m.size + wo_cout) * 4

    hsel_l, m_l, b_l = prepared[-1]
    cout_out = b_l.shape[0]
    ho_out = hsel_l.shape[1]
    wo_out = m_l.shape[2] // cout_out
    bytes_accessed += N * ho_out * wo_out * cout_out * 4

    out2d = pl.pallas_call(
        _encoder_fused_kernel,
        out_shape=jax.ShapeDtypeStruct((N, ho_out, wo_out * cout_out),
                                       x_nchw.dtype),
        grid=(N,),
        in_specs=in_specs,
        out_specs=pl.BlockSpec((1, ho_out, wo_out * cout_out),
                               lambda b: (b, 0, 0)),
        compiler_params=pltpu.CompilerParams(
            dimension_semantics=("parallel",)),
        cost_estimate=pl.CostEstimate(flops=int(flops), transcendentals=0,
                                      bytes_accessed=int(bytes_accessed)),
    )(*args)

    out = out2d.reshape(N, ho_out, wo_out, cout_out)       # NHWC
    return jnp.transpose(out, (0, 3, 1, 2))                 # NCHW


# ---------------------------------------------------------------------------
# Parameters (deterministic, PyTorch-default-like uniform init)
# ---------------------------------------------------------------------------
def init_encoder_params(key):
    layer_dims = [(3, 16), (16, 32), (32, 64)]
    params = []
    for cin, cout in layer_dims:
        key, wk, bk = jax.random.split(key, 3)
        fan_in = cin * 3 * 3
        bound = 1.0 / float(fan_in) ** 0.5
        w_oihw = jax.random.uniform(wk, (cout, cin, 3, 3), jnp.float32,
                                    -bound, bound)
        b = jax.random.uniform(bk, (cout,), jnp.float32, -bound, bound)
        params.append((w_oihw, b))
    return params


# ---------------------------------------------------------------------------
# Pure-JAX reference (correctness check only)
# ---------------------------------------------------------------------------
def _reference_forward(x_nchw, params):
    x = x_nchw
    for w_oihw, b in params:
        x = jax.lax.conv_general_dilated(
            x, w_oihw, window_strides=(2, 2), padding=((1, 1), (1, 1)),
            dimension_numbers=("NCHW", "OIHW", "NCHW"),
            precision=jax.lax.Precision.HIGHEST)
        x = jax.nn.relu(x + b[None, :, None, None])
    return x


if __name__ == "__main__":
    key = jax.random.PRNGKey(0)
    pkey, xkey = jax.random.split(key)

    params = init_encoder_params(pkey)
    x = jax.random.normal(xkey, (2, 3, 16, 16), dtype=jnp.float32)   # NCHW

    prepared = prepare_encoder_params(params, (16, 16))              # once

    fwd = jax.jit(encoder_forward)
    out = jax.block_until_ready(fwd(x, prepared))

    ref = jax.block_until_ready(_reference_forward(x, params))
    assert out.shape == (2, 64, 2, 2), out.shape
    assert jnp.allclose(out, ref, atol=1e-3, rtol=1e-3), \
        float(jnp.max(jnp.abs(out - ref)))

    print("KERNEL_OK")
</pallas_src>

<mosaic_0001>
module attributes {stable_mosaic.version = 11 : i64} {
  func.func @_encoder_fused_kernel(%arg0: i32, %arg1: memref<1x16x48xf32, #tpu.memory_space<vmem>>, %arg2: memref<3x8x16xf32, #tpu.memory_space<vmem>>, %arg3: memref<3x48x128xf32, #tpu.memory_space<vmem>>, %arg4: memref<1x128xf32, #tpu.memory_space<vmem>>, %arg5: memref<3x4x8xf32, #tpu.memory_space<vmem>>, %arg6: memref<3x128x128xf32, #tpu.memory_space<vmem>>, %arg7: memref<1x128xf32, #tpu.memory_space<vmem>>, %arg8: memref<3x2x4xf32, #tpu.memory_space<vmem>>, %arg9: memref<3x128x128xf32, #tpu.memory_space<vmem>>, %arg10: memref<1x128xf32, #tpu.memory_space<vmem>>, %arg11: memref<1x2x128xf32, #tpu.memory_space<vmem>>) attributes {dimension_semantics = [#tpu.dimension_semantics<parallel>], iteration_bounds = array<i64: 2>, scalar_prefetch = 0 : i64, scratch_operands = 0 : i64, tpu.core_type = #tpu.core_type<tc>, window_params = [{transform_indices = @transform_0, window_bounds = array<i64: 1, 16, 48>}, {pipeline_mode = #tpu.pipeline_mode<synchronous>, transform_indices = @transform_1, window_bounds = array<i64: 3, 8, 16>}, {pipeline_mode = #tpu.pipeline_mode<synchronous>, transform_indices = @transform_2, window_bounds = array<i64: 3, 48, 128>}, {pipeline_mode = #tpu.pipeline_mode<synchronous>, transform_indices = @transform_3, window_bounds = array<i64: 1, 128>}, {pipeline_mode = #tpu.pipeline_mode<synchronous>, transform_indices = @transform_4, window_bounds = array<i64: 3, 4, 8>}, {pipeline_mode = #tpu.pipeline_mode<synchronous>, transform_indices = @transform_5, window_bounds = array<i64: 3, 128, 128>}, {pipeline_mode = #tpu.pipeline_mode<synchronous>, transform_indices = @transform_6, window_bounds = array<i64: 1, 128>}, {pipeline_mode = #tpu.pipeline_mode<synchronous>, transform_indices = @transform_7, window_bounds = array<i64: 3, 2, 4>}, {pipeline_mode = #tpu.pipeline_mode<synchronous>, transform_indices = @transform_8, window_bounds = array<i64: 3, 128, 128>}, {pipeline_mode = #tpu.pipeline_mode<synchronous>, transform_indices = @transform_9, window_bounds = array<i64: 1, 128>}, {transform_indices = @transform_10, window_bounds = array<i64: 1, 2, 128>}]} {
    %c0 = arith.constant 0 : index
    %c0_0 = arith.constant 0 : index
    %c0_1 = arith.constant 0 : index
    %0 = vector.load %arg1[%c0, %c0_0, %c0_1] : memref<1x16x48xf32, #tpu.memory_space<vmem>>, vector<1x16x48xf32>
    %1 = vector.shape_cast %0 : vector<1x16x48xf32> to vector<16x48xf32>
    %c0_2 = arith.constant 0 : index
    %c0_3 = arith.constant 0 : index
    %c0_4 = arith.constant 0 : index
    %2 = vector.load %arg2[%c0_2, %c0_3, %c0_4] : memref<3x8x16xf32, #tpu.memory_space<vmem>>, vector<1x8x16xf32>
    %3 = vector.shape_cast %2 : vector<1x8x16xf32> to vector<8x16xf32>
    %cst = arith.constant dense<0.000000e+00> : vector<8x48xf32>
    %4 = tpu.matmul %3, %1, %cst {dimension_numbers = #tpu.dot_dimension_numbers<[1], [0], [0], [1], [0, 0, 1, 1], [], []>} : vector<8x16xf32>, vector<16x48xf32>, vector<8x48xf32> -> vector<8x48xf32>
    %c0_5 = arith.constant 0 : index
    %c0_6 = arith.constant 0 : index
    %c0_7 = arith.constant 0 : index
    %5 = vector.load %arg3[%c0_5, %c0_6, %c0_7] : memref<3x48x128xf32, #tpu.memory_space<vmem>>, vector<1x48x128xf32>
    %6 = vector.shape_cast %5 : vector<1x48x128xf32> to vector<48x128xf32>
    %cst_8 = arith.constant dense<0.000000e+00> : vector<8x128xf32>
    %7 = tpu.matmul %4, %6, %cst_8 {dimension_numbers = #tpu.dot_dimension_numbers<[1], [0], [0], [1], [0, 0, 1, 1], [], []>} : vector<8x48xf32>, vector<48x128xf32>, vector<8x128xf32> -> vector<8x128xf32>
    %c1 = arith.constant 1 : index
    %c0_9 = arith.constant 0 : index
    %c0_10 = arith.constant 0 : index
    %8 = vector.load %arg2[%c1, %c0_9, %c0_10] : memref<3x8x16xf32, #tpu.memory_space<vmem>>, vector<1x8x16xf32>
    %9 = vector.shape_cast %8 : vector<1x8x16xf32> to vector<8x16xf32>
    %cst_11 = arith.constant dense<0.000000e+00> : vector<8x48xf32>
    %10 = tpu.matmul %9, %1, %cst_11 {dimension_numbers = #tpu.dot_dimension_numbers<[1], [0], [0], [1], [0, 0, 1, 1], [], []>} : vector<8x16xf32>, vector<16x48xf32>, vector<8x48xf32> -> vector<8x48xf32>
    %c1_12 = arith.constant 1 : index
    %c0_13 = arith.constant 0 : index
    %c0_14 = arith.constant 0 : index
    %11 = vector.load %arg3[%c1_12, %c0_13, %c0_14] : memref<3x48x128xf32, #tpu.memory_space<vmem>>, vector<1x48x128xf32>
    %12 = vector.shape_cast %11 : vector<1x48x128xf32> to vector<48x128xf32>
    %cst_15 = arith.constant dense<0.000000e+00> : vector<8x128xf32>
    %13 = tpu.matmul %10, %12, %cst_15 {dimension_numbers = #tpu.dot_dimension_numbers<[1], [0], [0], [1], [0, 0, 1, 1], [], []>} : vector<8x48xf32>, vector<48x128xf32>, vector<8x128xf32> -> vector<8x128xf32>
    %14 = arith.addf %7, %13 : vector<8x128xf32>
    %c2 = arith.constant 2 : index
    %c0_16 = arith.constant 0 : index
    %c0_17 = arith.constant 0 : index
    %15 = vector.load %arg2[%c2, %c0_16, %c0_17] : memref<3x8x16xf32, #tpu.memory_space<vmem>>, vector<1x8x16xf32>
    %16 = vector.shape_cast %15 : vector<1x8x16xf32> to vector<8x16xf32>
    %cst_18 = arith.constant dense<0.000000e+00> : vector<8x48xf32>
    %17 = tpu.matmul %16, %1, %cst_18 {dimension_numbers = #tpu.dot_dimension_numbers<[1], [0], [0], [1], [0, 0, 1, 1], [], []>} : vector<8x16xf32>, vector<16x48xf32>, vector<8x48xf32> -> vector<8x48xf32>
    %c2_19 = arith.constant 2 : index
    %c0_20 = arith.constant 0 : index
    %c0_21 = arith.constant 0 : index
    %18 = vector.load %arg3[%c2_19, %c0_20, %c0_21] : memref<3x48x128xf32, #tpu.memory_space<vmem>>, vector<1x48x128xf32>
    %19 = vector.shape_cast %18 : vector<1x48x128xf32> to vector<48x128xf32>
    %cst_22 = arith.constant dense<0.000000e+00> : vector<8x128xf32>
    %20 = tpu.matmul %17, %19, %cst_22 {dimension_numbers = #tpu.dot_dimension_numbers<[1], [0], [0], [1], [0, 0, 1, 1], [], []>} : vector<8x48xf32>, vector<48x128xf32>, vector<8x128xf32> -> vector<8x128xf32>
    %21 = arith.addf %14, %20 : vector<8x128xf32>
    %c0_23 = arith.constant 0 : index
    %c0_24 = arith.constant 0 : index
    %22 = vector.load %arg4[%c0_23, %c0_24] : memref<1x128xf32, #tpu.memory_space<vmem>>, vector<1x128xf32>
    %23 = vector.broadcast %22 : vector<1x128xf32> to vector<8x128xf32>
    %24 = arith.addf %21, %23 : vector<8x128xf32>
    %cst_25 = arith.constant 0.000000e+00 : f32
    %25 = vector.broadcast %cst_25 : f32 to vector<8x128xf32>
    %26 = arith.maximumf %24, %25 : vector<8x128xf32>
    %c0_26 = arith.constant 0 : index
    %c0_27 = arith.constant 0 : index
    %c0_28 = arith.constant 0 : index
    %27 = vector.load %arg5[%c0_26, %c0_27, %c0_28] : memref<3x4x8xf32, #tpu.memory_space<vmem>>, vector<1x4x8xf32>
    %28 = vector.shape_cast %27 : vector<1x4x8xf32> to vector<4x8xf32>
    %cst_29 = arith.constant dense<0.000000e+00> : vector<4x128xf32>
    %29 = tpu.matmul %28, %26, %cst_29 {dimension_numbers = #tpu.dot_dimension_numbers<[1], [0], [0], [1], [0, 0, 1, 1], [], []>} : vector<4x8xf32>, vector<8x128xf32>, vector<4x128xf32> -> vector<4x128xf32>
    %c0_30 = arith.constant 0 : index
    %c0_31 = arith.constant 0 : index
    %c0_32 = arith.constant 0 : index
    %30 = vector.load %arg6[%c0_30, %c0_31, %c0_32] : memref<3x128x128xf32, #tpu.memory_space<vmem>>, vector<1x128x128xf32>
    %31 = vector.shape_cast %30 : vector<1x128x128xf32> to vector<128x128xf32>
    %cst_33 = arith.constant dense<0.000000e+00> : vector<4x128xf32>
    %32 = tpu.matmul %29, %31, %cst_33 {dimension_numbers = #tpu.dot_dimension_numbers<[1], [0], [0], [1], [0, 0, 1, 1], [], []>} : vector<4x128xf32>, vector<128x128xf32>, vector<4x128xf32> -> vector<4x128xf32>
    %c1_34 = arith.constant 1 : index
    %c0_35 = arith.constant 0 : index
    %c0_36 = arith.constant 0 : index
    %33 = vector.load %arg5[%c1_34, %c0_35, %c0_36] : memref<3x4x8xf32, #tpu.memory_space<vmem>>, vector<1x4x8xf32>
    %34 = vector.shape_cast %33 : vector<1x4x8xf32> to vector<4x8xf32>
    %cst_37 = arith.constant dense<0.000000e+00> : vector<4x128xf32>
    %35 = tpu.matmul %34, %26, %cst_37 {dimension_numbers = #tpu.dot_dimension_numbers<[1], [0], [0], [1], [0, 0, 1, 1], [], []>} : vector<4x8xf32>, vector<8x128xf32>, vector<4x128xf32> -> vector<4x128xf32>
    %c1_38 = arith.constant 1 : index
    %c0_39 = arith.constant 0 : index
    %c0_40 = arith.constant 0 : index
    %36 = vector.load %arg6[%c1_38, %c0_39, %c0_40] : memref<3x128x128xf32, #tpu.memory_space<vmem>>, vector<1x128x128xf32>
    %37 = vector.shape_cast %36 : vector<1x128x128xf32> to vector<128x128xf32>
    %cst_41 = arith.constant dense<0.000000e+00> : vector<4x128xf32>
    %38 = tpu.matmul %35, %37, %cst_41 {dimension_numbers = #tpu.dot_dimension_numbers<[1], [0], [0], [1], [0, 0, 1, 1], [], []>} : vector<4x128xf32>, vector<128x128xf32>, vector<4x128xf32> -> vector<4x128xf32>
    %39 = arith.addf %32, %38 : vector<4x128xf32>
    %c2_42 = arith.constant 2 : index
    %c0_43 = arith.constant 0 : index
    %c0_44 = arith.constant 0 : index
    %40 = vector.load %arg5[%c2_42, %c0_43, %c0_44] : memref<3x4x8xf32, #tpu.memory_space<vmem>>, vector<1x4x8xf32>
    %41 = vector.shape_cast %40 : vector<1x4x8xf32> to vector<4x8xf32>
    %cst_45 = arith.constant dense<0.000000e+00> : vector<4x128xf32>
    %42 = tpu.matmul %41, %26, %cst_45 {dimension_numbers = #tpu.dot_dimension_numbers<[1], [0], [0], [1], [0, 0, 1, 1], [], []>} : vector<4x8xf32>, vector<8x128xf32>, vector<4x128xf32> -> vector<4x128xf32>
    %c2_46 = arith.constant 2 : index
    %c0_47 = arith.constant 0 : index
    %c0_48 = arith.constant 0 : index
    %43 = vector.load %arg6[%c2_46, %c0_47, %c0_48] : memref<3x128x128xf32, #tpu.memory_space<vmem>>, vector<1x128x128xf32>
    %44 = vector.shape_cast %43 : vector<1x128x128xf32> to vector<128x128xf32>
    %cst_49 = arith.constant dense<0.000000e+00> : vector<4x128xf32>
    %45 = tpu.matmul %42, %44, %cst_49 {dimension_numbers = #tpu.dot_dimension_numbers<[1], [0], [0], [1], [0, 0, 1, 1], [], []>} : vector<4x128xf32>, vector<128x128xf32>, vector<4x128xf32> -> vector<4x128xf32>
    %46 = arith.addf %39, %45 : vector<4x128xf32>
    %c0_50 = arith.constant 0 : index
    %c0_51 = arith.constant 0 : index
    %47 = vector.load %arg7[%c0_50, %c0_51] : memref<1x128xf32, #tpu.memory_space<vmem>>, vector<1x128xf32>
    %48 = vector.broadcast %47 : vector<1x128xf32> to vector<4x128xf32>
    %49 = arith.addf %46, %48 : vector<4x128xf32>
    %cst_52 = arith.constant 0.000000e+00 : f32
    %50 = vector.broadcast %cst_52 : f32 to vector<4x128xf32>
    %51 = arith.maximumf %49, %50 : vector<4x128xf32>
    %c0_53 = arith.constant 0 : index
    %c0_54 = arith.constant 0 : index
    %c0_55 = arith.constant 0 : index
    %52 = vector.load %arg8[%c0_53, %c0_54, %c0_55] : memref<3x2x4xf32, #tpu.memory_space<vmem>>, vector<1x2x4xf32>
    %53 = vector.shape_cast %52 : vector<1x2x4xf32> to vector<2x4xf32>
    %cst_56 = arith.constant dense<0.000000e+00> : vector<2x128xf32>
    %54 = tpu.matmul %53, %51, %cst_56 {dimension_numbers = #tpu.dot_dimension_numbers<[1], [0], [0], [1], [0, 0, 1, 1], [], []>} : vector<2x4xf32>, vector<4x128xf32>, vector<2x128xf32> -> vector<2x128xf32>
    %c0_57 = arith.constant 0 : index
    %c0_58 = arith.constant 0 : index
    %c0_59 = arith.constant 0 : index
    %55 = vector.load %arg9[%c0_57, %c0_58, %c0_59] : memref<3x128x128xf32, #tpu.memory_space<vmem>>, vector<1x128x128xf32>
    %56 = vector.shape_cast %55 : vector<1x128x128xf32> to vector<128x128xf32>
    %cst_60 = arith.constant dense<0.000000e+00> : vector<2x128xf32>
    %57 = tpu.matmul %54, %56, %cst_60 {dimension_numbers = #tpu.dot_dimension_numbers<[1], [0], [0], [1], [0, 0, 1, 1], [], []>} : vector<2x128xf32>, vector<128x128xf32>, vector<2x128xf32> -> vector<2x128xf32>
    %c1_61 = arith.constant 1 : index
    %c0_62 = arith.constant 0 : index
    %c0_63 = arith.constant 0 : index
    %58 = vector.load %arg8[%c1_61, %c0_62, %c0_63] : memref<3x2x4xf32, #tpu.memory_space<vmem>>, vector<1x2x4xf32>
    %59 = vector.shape_cast %58 : vector<1x2x4xf32> to vector<2x4xf32>
    %cst_64 = arith.constant dense<0.000000e+00> : vector<2x128xf32>
    %60 = tpu.matmul %59, %51, %cst_64 {dimension_numbers = #tpu.dot_dimension_numbers<[1], [0], [0], [1], [0, 0, 1, 1], [], []>} : vector<2x4xf32>, vector<4x128xf32>, vector<2x128xf32> -> vector<2x128xf32>
    %c1_65 = arith.constant 1 : index
    %c0_66 = arith.constant 0 : index
    %c0_67 = arith.constant 0 : index
    %61 = vector.load %arg9[%c1_65, %c0_66, %c0_67] : memref<3x128x128xf32, #tpu.memory_space<vmem>>, vector<1x128x128xf32>
    %62 = vector.shape_cast %61 : vector<1x128x128xf32> to vector<128x128xf32>
    %cst_68 = arith.constant dense<0.000000e+00> : vector<2x128xf32>
    %63 = tpu.matmul %60, %62, %cst_68 {dimension_numbers = #tpu.dot_dimension_numbers<[1], [0], [0], [1], [0, 0, 1, 1], [], []>} : vector<2x128xf32>, vector<128x128xf32>, vector<2x128xf32> -> vector<2x128xf32>
    %64 = arith.addf %57, %63 : vector<2x128xf32>
    %c2_69 = arith.constant 2 : index
    %c0_70 = arith.constant 0 : index
    %c0_71 = arith.constant 0 : index
    %65 = vector.load %arg8[%c2_69, %c0_70, %c0_71] : memref<3x2x4xf32, #tpu.memory_space<vmem>>, vector<1x2x4xf32>
    %66 = vector.shape_cast %65 : vector<1x2x4xf32> to vector<2x4xf32>
    %cst_72 = arith.constant dense<0.000000e+00> : vector<2x128xf32>
    %67 = tpu.matmul %66, %51, %cst_72 {dimension_numbers = #tpu.dot_dimension_numbers<[1], [0], [0], [1], [0, 0, 1, 1], [], []>} : vector<2x4xf32>, vector<4x128xf32>, vector<2x128xf32> -> vector<2x128xf32>
    %c2_73 = arith.constant 2 : index
    %c0_74 = arith.constant 0 : index
    %c0_75 = arith.constant 0 : index
    %68 = vector.load %arg9[%c2_73, %c0_74, %c0_75] : memref<3x128x128xf32, #tpu.memory_space<vmem>>, vector<1x128x128xf32>
    %69 = vector.shape_cast %68 : vector<1x128x128xf32> to vector<128x128xf32>
    %cst_76 = arith.constant dense<0.000000e+00> : vector<2x128xf32>
    %70 = tpu.matmul %67, %69, %cst_76 {dimension_numbers = #tpu.dot_dimension_numbers<[1], [0], [0], [1], [0, 0, 1, 1], [], []>} : vector<2x128xf32>, vector<128x128xf32>, vector<2x128xf32> -> vector<2x128xf32>
    %71 = arith.addf %64, %70 : vector<2x128xf32>
    %c0_77 = arith.constant 0 : index
    %c0_78 = arith.constant 0 : index
    %72 = vector.load %arg10[%c0_77, %c0_78] : memref<1x128xf32, #tpu.memory_space<vmem>>, vector<1x128xf32>
    %73 = vector.broadcast %72 : vector<1x128xf32> to vector<2x128xf32>
    %74 = arith.addf %71, %73 : vector<2x128xf32>
    %cst_79 = arith.constant 0.000000e+00 : f32
    %75 = vector.broadcast %cst_79 : f32 to vector<2x128xf32>
    %76 = arith.maximumf %74, %75 : vector<2x128xf32>
    %c0_80 = arith.constant 0 : index
    %c0_81 = arith.constant 0 : index
    %c0_82 = arith.constant 0 : index
    %77 = vector.load %arg11[%c0_80, %c0_81, %c0_82] : memref<1x2x128xf32, #tpu.memory_space<vmem>>, vector<1x2x128xf32>
    %78 = vector.shape_cast %77 : vector<1x2x128xf32> to vector<2x128xf32>
    %79 = vector.shape_cast %76 : vector<2x128xf32> to vector<1x2x128xf32>
    tpu.vector_store %arg11[%c0_80, %c0_81, %c0_82], %79 {strides = array<i32>} : memref<1x2x128xf32, #tpu.memory_space<vmem>>, vector<1x2x128xf32>,
    return
  }
  func.func @transform_0(%arg0: i32) -> (i32, i32, i32) {
    %c0_i32 = arith.constant 0 : i32
    %c0_i32_0 = arith.constant 0 : i32
    %c0_i32_1 = arith.constant 0 : i32
    return %arg0, %c0_i32, %c0_i32_0 : i32, i32, i32
  }
  func.func @transform_1(%arg0: i32) -> (i32, i32, i32) {
    %c0_i32 = arith.constant 0 : i32
    %c0_i32_0 = arith.constant 0 : i32
    %c0_i32_1 = arith.constant 0 : i32
    %c0_i32_2 = arith.constant 0 : i32
    return %c0_i32, %c0_i32_0, %c0_i32_1 : i32, i32, i32
  }
  func.func @transform_2(%arg0: i32) -> (i32, i32, i32) {
    %c0_i32 = arith.constant 0 : i32
    %c0_i32_0 = arith.constant 0 : i32
    %c0_i32_1 = arith.constant 0 : i32
    %c0_i32_2 = arith.constant 0 : i32
    return %c0_i32, %c0_i32_0, %c0_i32_1 : i32, i32, i32
  }
  func.func @transform_3(%arg0: i32) -> (i32, i32) {
    %c0_i32 = arith.constant 0 : i32
    %c0_i32_0 = arith.constant 0 : i32
    %c0_i32_1 = arith.constant 0 : i32
    return %c0_i32, %c0_i32_0 : i32, i32
  }
  func.func @transform_4(%arg0: i32) -> (i32, i32, i32) {
    %c0_i32 = arith.constant 0 : i32
    %c0_i32_0 = arith.constant 0 : i32
    %c0_i32_1 = arith.constant 0 : i32
    %c0_i32_2 = arith.constant 0 : i32
    return %c0_i32, %c0_i32_0, %c0_i32_1 : i32, i32, i32
  }
  func.func @transform_5(%arg0: i32) -> (i32, i32, i32) {
    %c0_i32 = arith.constant 0 : i32
    %c0_i32_0 = arith.constant 0 : i32
    %c0_i32_1 = arith.constant 0 : i32
    %c0_i32_2 = arith.constant 0 : i32
    return %c0_i32, %c0_i32_0, %c0_i32_1 : i32, i32, i32
  }
  func.func @transform_6(%arg0: i32) -> (i32, i32) {
    %c0_i32 = arith.constant 0 : i32
    %c0_i32_0 = arith.constant 0 : i32
    %c0_i32_1 = arith.constant 0 : i32
    return %c0_i32, %c0_i32_0 : i32, i32
  }
  func.func @transform_7(%arg0: i32) -> (i32, i32, i32) {
    %c0_i32 = arith.constant 0 : i32
    %c0_i32_0 = arith.constant 0 : i32
    %c0_i32_1 = arith.constant 0 : i32
    %c0_i32_2 = arith.constant 0 : i32
    return %c0_i32, %c0_i32_0, %c0_i32_1 : i32, i32, i32
  }
  func.func @transform_8(%arg0: i32) -> (i32, i32, i32) {
    %c0_i32 = arith.constant 0 : i32
    %c0_i32_0 = arith.constant 0 : i32
    %c0_i32_1 = arith.constant 0 : i32
    %c0_i32_2 = arith.constant 0 : i32
    return %c0_i32, %c0_i32_0, %c0_i32_1 : i32, i32, i32
  }
  func.func @transform_9(%arg0: i32) -> (i32, i32) {
    %c0_i32 = arith.constant 0 : i32
    %c0_i32_0 = arith.constant 0 : i32
    %c0_i32_1 = arith.constant 0 : i32
    return %c0_i32, %c0_i32_0 : i32, i32
  }
  func.func @transform_10(%arg0: i32) -> (i32, i32, i32) {
    %c0_i32 = arith.constant 0 : i32
    %c0_i32_0 = arith.constant 0 : i32
    %c0_i32_1 = arith.constant 0 : i32
    return %arg0, %c0_i32, %c0_i32_0 : i32, i32, i32
  }
}

</mosaic_0001>

<llo_original>
// kernel: tile.19
$region0: #{tile.19}
  %s0 = inlined_call_operand.vmem [shape: f32[8,16], index: 0, kind: input, shape index: {}]
  %s1 = inlined_call_operand.vmem [shape: f32[1,128], index: 1, kind: output, shape index: {}]
  $region1: #{tile.19} parent=0
    #allocation0 [shape = 'u8[4096]{0}', space=vmem, size = 0x1000, scoped, tag = 'scoped mem for output reshape']
    %v2 = vld [vmem:[%s0] sm:$0x1]
    %vm3 = vcmask 130048
    %4 = vst.msk [vmem:[#allocation0] sm:$0x1] %vm3, %v2
    %s5 = scalar_lea.vmem %s0, 7
    %v6 = vld [vmem:[%s5] sm:$0x1]
    %7 = vrot.lane.b32.xlu0 %v6, 112
    %v8 = vpop.permute.xlu0 %7
    %vm9 = vcmask 1048448
    %10 = vst.msk [vmem:[#allocation0] sm:$0x1] %vm9, %v8
    %s11 = scalar_lea.vmem %s0, 6
    %v12 = vld [vmem:[%s11] sm:$0x1]
    %13 = vrot.lane.b32.xlu0 %v12, 96
    %v14 = vpop.permute.xlu0 %13
    %vm15 = vcmask 917248
    %16 = vst.msk [vmem:[#allocation0] sm:$0x1] %vm15, %v14
    %s17 = scalar_lea.vmem %s0, 5
    %v18 = vld [vmem:[%s17] sm:$0x1]
    %19 = vrot.lane.b32.xlu0 %v18, 80
    %v20 = vpop.permute.xlu0 %19
    %vm21 = vcmask 786048
    %22 = vst.msk [vmem:[#allocation0] sm:$0x1] %vm21, %v20
    %s23 = scalar_lea.vmem %s0, 4
    %v24 = vld [vmem:[%s23] sm:$0x1]
    %25 = vrot.lane.b32.xlu0 %v24, 64
    %v26 = vpop.permute.xlu0 %25
    %vm27 = vcmask 654848
    %28 = vst.msk [vmem:[#allocation0] sm:$0x1] %vm27, %v26
    %s29 = scalar_lea.vmem %s0, 3
    %v30 = vld [vmem:[%s29] sm:$0x1]
    %31 = vrot.lane.b32.xlu0 %v30, 48
    %v32 = vpop.permute.xlu0 %31
    %vm33 = vcmask 523648
    %34 = vst.msk [vmem:[#allocation0] sm:$0x1] %vm33, %v32
    %s35 = scalar_lea.vmem %s0, 2
    %v36 = vld [vmem:[%s35] sm:$0x1]
    %37 = vrot.lane.b32.xlu0 %v36, 32
    %v38 = vpop.permute.xlu0 %37
    %vm39 = vcmask 392448
    %40 = vst.msk [vmem:[#allocation0] sm:$0x1] %vm39, %v38
    %s41 = scalar_lea.vmem %s0, 1
    %v42 = vld [vmem:[%s41] sm:$0x1]
    %43 = vrot.lane.b32.xlu0 %v42, 16
    %v44 = vpop.permute.xlu0 %43
    %vm45 = vcmask 261248
    %46 = vst.msk [vmem:[#allocation0] sm:$0x1] %vm45, %v44
    %s48 = ssub.s32 2, 1
    %v49 = vld [vmem:[#allocation0] sm:%s48]
    %s51 = ssub.s32 2, 1
    %52 = vst [vmem:[%s1] sm:%s51] %v49

// kernel: tile.18
$region0: #{tile.18}
  #allocation0 [shape = 's32[1]{0}', space=sflag, size = 0x4, scoped, tag = 'scoped memory for tile.18']
  %s0 = inlined_call_operand.vmem [shape: f32[16], index: 0, kind: input, shape index: {}]
  %s1 = inlined_call_operand.vmem [shape: f32[8,16], index: 1, kind: output, shape index: {}]
  // Predicated region
  $region2: #{tile.18} parent=0 // pred_check
    _
  $region3: #{tile.18} parent=0 // pred_check_branch
    %3 = sbr.rel (0) target = $region5
  $region4: #{tile.18} parent=0 // pred_region
    _
  $region5: #{tile.18} parent=0 // pred_fallthru
    _
  %v4 = vld [vmem:[%s0] ss:$0 sm:$0xff]
  %5 = vst [vmem:[%s1] sm:$0xff] %v4

// kernel: tile.23
$region0: #{tile.23}
  #allocation0 [shape = 's32[1]{0}', space=sflag, size = 0x4, scoped, tag = 'scoped memory for tile.23']
  %s0 = inlined_call_operand.vmem [shape: f32[32], index: 0, kind: input, shape index: {}]
  %s1 = inlined_call_operand.vmem [shape: f32[4,32], index: 1, kind: output, shape index: {}]
  // Predicated region
  $region2: #{tile.23} parent=0 // pred_check
    _
  $region3: #{tile.23} parent=0 // pred_check_branch
    %3 = sbr.rel (0) target = $region5
  $region4: #{tile.23} parent=0 // pred_region
    _
  $region5: #{tile.23} parent=0 // pred_fallthru
    _
  %v4 = vld [vmem:[%s0] ss:$0 sm:$0xff]
  %5 = vst [vmem:[%s1] sm:$0xf] %v4

// kernel: tile.24
$region0: #{tile.24}
  %s0 = inlined_call_operand.vmem [shape: f32[4,32], index: 0, kind: input, shape index: {}]
  %s1 = inlined_call_operand.vmem [shape: f32[1,128], index: 1, kind: output, shape index: {}]
  $region1: #{tile.24} parent=0
    #allocation0 [shape = 'u8[4096]{0}', space=vmem, size = 0x1000, scoped, tag = 'scoped mem for output reshape']
    #allocation1 [shape = 'u8[4096]{0}', space=vmem, size = 0x1000, scoped, tag = 'scoped mem for input reshape']
    %s3 = ssub.s32 16, 1
    %v4 = vld [vmem:[%s0] sm:%s3]
    %5 = vst [vmem:[#allocation1] sm:%s3] %v4
    %v6 = vld [vmem:[#allocation1] sm:$0x1]
    %vm7 = vcmask 261120
    %8 = vst.msk [vmem:[#allocation0] sm:$0x1] %vm7, %v6
    %s9 = scalar_lea.vmem [#allocation1], 3
    %v10 = vld [vmem:[%s9] sm:$0x1]
    %11 = vrot.lane.b32.xlu0 %v10, 96
    %v12 = vpop.permute.xlu0 %11
    %vm13 = vcmask 1048320
    %14 = vst.msk [vmem:[#allocation0] sm:$0x1] %vm13, %v12
    %s15 = scalar_lea.vmem [#allocation1], 2
    %v16 = vld [vmem:[%s15] sm:$0x1]
    %17 = vrot.lane.b32.xlu0 %v16, 64
    %v18 = vpop.permute.xlu0 %17
    %vm19 = vcmask 785920
    %20 = vst.msk [vmem:[#allocation0] sm:$0x1] %vm19, %v18
    %s21 = scalar_lea.vmem [#allocation1], 1
    %v22 = vld [vmem:[%s21] sm:$0x1]
    %23 = vrot.lane.b32.xlu0 %v22, 32
    %v24 = vpop.permute.xlu0 %23
    %vm25 = vcmask 523520
    %26 = vst.msk [vmem:[#allocation0] sm:$0x1] %vm25, %v24
    %s28 = ssub.s32 2, 1
    %v29 = vld [vmem:[#allocation0] sm:%s28]
    %s31 = ssub.s32 2, 1
    %32 = vst [vmem:[%s1] sm:%s31] %v29

// kernel: tile.28
$region0: #{tile.28}
  #allocation0 [shape = 's32[1]{0}', space=sflag, size = 0x4, scoped, tag = 'scoped memory for tile.28']
  %s0 = inlined_call_operand.vmem [shape: f32[64], index: 0, kind: input, shape index: {}]
  %s1 = inlined_call_operand.vmem [shape: f32[2,64], index: 1, kind: output, shape index: {}]
  // Predicated region
  $region2: #{tile.28} parent=0 // pred_check
    _
  $region3: #{tile.28} parent=0 // pred_check_branch
    %3 = sbr.rel (0) target = $region5
  $region4: #{tile.28} parent=0 // pred_region
    _
  $region5: #{tile.28} parent=0 // pred_fallthru
    _
  %v4 = vld [vmem:[%s0] ss:$0 sm:$0xff]
  %5 = vst [vmem:[%s1] sm:$0x3] %v4

// kernel: tile.29
$region0: #{tile.29}
  %s0 = inlined_call_operand.vmem [shape: f32[2,64], index: 0, kind: input, shape index: {}]
  %s1 = inlined_call_operand.vmem [shape: f32[1,128], index: 1, kind: output, shape index: {}]
  $region1: #{tile.29} parent=0
    #allocation0 [shape = 'u8[4096]{0}', space=vmem, size = 0x1000, scoped, tag = 'scoped mem for output reshape']
    #allocation1 [shape = 'u8[4096]{0}', space=vmem, size = 0x1000, scoped, tag = 'scoped mem for input reshape']
    %s3 = ssub.s32 4, 1
    %v4 = vld [vmem:[%s0] sm:%s3]
    %5 = vst [vmem:[#allocation1] sm:%s3] %v4
    %v6 = vld [vmem:[#allocation1] sm:$0x1]
    %vm7 = vcmask 523264
    %8 = vst.msk [vmem:[#allocation0] sm:$0x1] %vm7, %v6
    %s9 = scalar_lea.vmem [#allocation1], 1
    %v10 = vld [vmem:[%s9] sm:$0x1]
    %11 = vrot.lane.b32.xlu0 %v10, 64
    %v12 = vpop.permute.xlu0 %11
    %vm13 = vcmask 1048064
    %14 = vst.msk [vmem:[#allocation0] sm:$0x1] %vm13, %v12
    %s16 = ssub.s32 2, 1
    %v17 = vld [vmem:[#allocation0] sm:%s16]
    %s19 = ssub.s32 2, 1
    %20 = vst [vmem:[%s1] sm:%s19] %v17

// kernel: encoder_forward.1
$region0: #{encoder_forward.1}
  #allocation0 [shape = 'u32[]', space=smem, size = 0x4, offset = 0x4, fixed_abs, tag = 'smem constant byte address 0x4 - core index']
  #allocation1 [shape = 'u32[72,128]{1,0:T(1,128)}', space=vmem, size = 0x9000, scoped, tag = 'internal scratch']
  %s0 = inlined_call_operand.vmem [shape: f32[2,16,48], index: 0, kind: input, shape index: {}]
  %s1 = inlined_call_operand.vmem [shape: f32[3,8,16], index: 1, kind: input, shape index: {}]
  %s2 = inlined_call_operand.vmem [shape: f32[3,48,128], index: 2, kind: input, shape index: {}]
  %s3 = inlined_call_operand.vmem [shape: f32[1,128], index: 3, kind: input, shape index: {}]
  %s4 = inlined_call_operand.vmem [shape: f32[3,4,8], index: 4, kind: input, shape index: {}]
  %s5 = inlined_call_operand.hbm [shape: f32[3,128,128], index: 5, kind: input, shape index: {}]
  %s6 = inlined_call_operand.vmem [shape: f32[1,128], index: 6, kind: input, shape index: {}]
  %s7 = inlined_call_operand.vmem [shape: f32[3,2,4], index: 7, kind: input, shape index: {}]
  %s8 = inlined_call_operand.hbm [shape: f32[3,128,128], index: 8, kind: input, shape index: {}]
  %s9 = inlined_call_operand.vmem [shape: f32[1,128], index: 9, kind: input, shape index: {}]
  %s10 = inlined_call_operand.vmem [shape: f32[2,2,128], index: 10, kind: output, shape index: {}]
  %s11 = sld [smem:[#allocation0]]
  $region81: #{encoder_forward.1} parent=0
    _
  %s13 = ssub.s32 1, %s11
  %s14 = scalar_select 0, %s13, %s11
  $region1: #{encoder_forward.1} parent=0
    #allocation2 [shape = 'u8[196608]{0}', space=vmem, size = 0x30000, scoped, tag = 'input window, operand 5, single buffered']
    #allocation3 [shape = 's32[2]{0}', space=sflag, size = 0x8, scoped, tag = 'scoped memory for encoder_forward.1']
    #allocation4 [shape = 'u8[196608]{0}', space=vmem, size = 0x30000, scoped, tag = 'input window, operand 8, single buffered']
    #allocation5 [shape = 's32[1]{0}', space=sflag, size = 0x4, scoped, tag = 'scoped memory for encoder_forward.1']
    %15 = vsyncpa [#allocation3], 0
    %16 = vsyncpa [#allocation5], 0
    loop: start=0, step=1, limit=4
    $region2: #{encoder_forward.1} parent=1 // loop_pre_header
      _
    $region3: #{encoder_forward.1} parent=1 // loop_header
      %s18 = sphi 0, %s22
      %p19 = scmp.ge.s32.totalorder %s18, 4
      %s28 = sphi 0, %s30
      %s31 = sphi 0, %s28
      %s32 = sphi 0, %s31
      %s48 = sphi 0, %s32
      %s52 = sphi 0, %s52
      %s54 = sphi 0, %s52
      %s55 = sphi 0, %s54
      %s69 = sphi 0, %s55
      %s73 = sphi 0, %s73
      %s75 = sphi 0, %s73
      %s76 = sphi 0, %s75
      %s90 = sphi 0, %s76
      %s94 = sphi 0, %s94
      %s96 = sphi 0, %s94
      %s97 = sphi 0, %s96
      %s111 = sphi 0, %s97
      %s115 = sphi 0, %s115
      %s117 = sphi 0, %s115
      %s118 = sphi 0, %s117
      %s132 = sphi 0, %s118
      %s136 = sphi 0, %s136
      %s138 = sphi 0, %s136
      %s139 = sphi 0, %s138
      %s153 = sphi 0, %s139
      %s157 = sphi 0, %s157
      %s159 = sphi 0, %s157
      %s160 = sphi 0, %s159
      %s174 = sphi 0, %s160
      %s178 = sphi 0, %s178
      %s180 = sphi 0, %s178
      %s181 = sphi 0, %s180
      %s195 = sphi 0, %s181
      %s199 = sphi 0, %s199
      %s201 = sphi 0, %s199
      %s202 = sphi 0, %s201
      %s216 = sphi 0, %s202
      %s220 = sphi 0, %s220
      %s222 = sphi 0, %s220
      %s223 = sphi 0, %s222
      %s237 = sphi 0, %s223
      %s243 = sphi 0, %s245
      %s246 = sphi 0, %s243
      %s247 = sphi 0, %s246
      %s263 = sphi 0, %s247
    $region4: #{encoder_forward.1} parent=1 // loop_header_branch
      %21 = sbr.rel (%p19) target = $region8
    $region5: #{encoder_forward.1} parent=1 // loop_body
      %s23 = ssub.s32 %s18, 1
      %s24 = ssub.s32 %s18, 2
      %s25 = sadd.s32 %s18, 1
      %s26 = ssub.s32 %s18, %s25
      %p27 = scmp.eq.s32.totalorder %s26, 0
      %s29 = sadd.s32 %s28, 1
      %s30 = scalar_select %p27, %s28, %s29
      %p33 = pneg %p27
      %p34 = scmp.eq.s32.totalorder %s18, 1
      %p35 = por %p33, %p34
      %p36 = scmp.ne.s32.totalorder %s28, %s31
      %p37 = scmp.eq.s32.totalorder %s18, 0
      %p38 = por %p36, %p37
      %p39 = scmp.ne.s32.totalorder %s28, %s31
      %p40 = scmp.eq.s32.totalorder %s23, 1
      %p41 = por %p39, %p40
      %p42 = scmp.ne.s32.totalorder %s31, %s32
      %p43 = scmp.eq.s32.totalorder %s23, 0
      %p44 = por %p42, %p43
      %p45 = scmp.ne.s32.totalorder %s31, %s32
      %p46 = scmp.eq.s32.totalorder %s24, 1
      %p47 = por %p45, %p46
      %p49 = scmp.ne.s32.totalorder %s32, %s48
      %p50 = scmp.eq.s32.totalorder %s24, 0
      %p51 = por %p49, %p50
      %s53 = sadd.s32 %s52, 1
      %p56 = scmp.eq.s32.totalorder %s18, 1
      %p57 = scmp.ne.s32.totalorder %s52, %s54
      %p58 = scmp.eq.s32.totalorder %s18, 0
      %p59 = por %p57, %p58
      %p60 = scmp.ne.s32.totalorder %s52, %s54
      %p61 = scmp.eq.s32.totalorder %s23, 1
      %p62 = por %p60, %p61
      %p63 = scmp.ne.s32.totalorder %s54, %s55
      %p64 = scmp.eq.s32.totalorder %s23, 0
      %p65 = por %p63, %p64
      %p66 = scmp.ne.s32.totalorder %s54, %s55
      %p67 = scmp.eq.s32.totalorder %s24, 1
      %p68 = por %p66, %p67
      %p70 = scmp.ne.s32.totalorder %s55, %s69
      %p71 = scmp.eq.s32.totalorder %s24, 0
      %p72 = por %p70, %p71
      %s74 = sadd.s32 %s73, 1
      %p77 = scmp.eq.s32.totalorder %s18, 1
      %p78 = scmp.ne.s32.totalorder %s73, %s75
      %p79 = scmp.eq.s32.totalorder %s18, 0
      %p80 = por %p78, %p79
      %p81 = scmp.ne.s32.totalorder %s73, %s75
      %p82 = scmp.eq.s32.totalorder %s23, 1
      %p83 = por %p81, %p82
      %p84 = scmp.ne.s32.totalorder %s75, %s76
      %p85 = scmp.eq.s32.totalorder %s23, 0
      %p86 = por %p84, %p85
      %p87 = scmp.ne.s32.totalorder %s75, %s76
      %p88 = scmp.eq.s32.totalorder %s24, 1
      %p89 = por %p87, %p88
      %p91 = scmp.ne.s32.totalorder %s76, %s90
      %p92 = scmp.eq.s32.totalorder %s24, 0
      %p93 = por %p91, %p92
      %s95 = sadd.s32 %s94, 1
      %p98 = scmp.eq.s32.totalorder %s18, 1
      %p99 = scmp.ne.s32.totalorder %s94, %s96
      %p100 = scmp.eq.s32.totalorder %s18, 0
      %p101 = por %p99, %p100
      %p102 = scmp.ne.s32.totalorder %s94, %s96
      %p103 = scmp.eq.s32.totalorder %s23, 1
      %p104 = por %p102, %p103
      %p105 = scmp.ne.s32.totalorder %s96, %s97
      %p106 = scmp.eq.s32.totalorder %s23, 0
      %p107 = por %p105, %p106
      %p108 = scmp.ne.s32.totalorder %s96, %s97
      %p109 = scmp.eq.s32.totalorder %s24, 1
      %p110 = por %p108, %p109
      %p112 = scmp.ne.s32.totalorder %s97, %s111
      %p113 = scmp.eq.s32.totalorder %s24, 0
      %p114 = por %p112, %p113
      %s116 = sadd.s32 %s115, 1
      %p119 = scmp.eq.s32.totalorder %s18, 1
      %p120 = scmp.ne.s32.totalorder %s115, %s117
      %p121 = scmp.eq.s32.totalorder %s18, 0
      %p122 = por %p120, %p121
      %p123 = scmp.ne.s32.totalorder %s115, %s117
      %p124 = scmp.eq.s32.totalorder %s23, 1
      %p125 = por %p123, %p124
      %p126 = scmp.ne.s32.totalorder %s117, %s118
      %p127 = scmp.eq.s32.totalorder %s23, 0
      %p128 = por %p126, %p127
      %p129 = scmp.ne.s32.totalorder %s117, %s118
      %p130 = scmp.eq.s32.totalorder %s24, 1
      %p131 = por %p129, %p130
      %p133 = scmp.ne.s32.totalorder %s118, %s132
      %p134 = scmp.eq.s32.totalorder %s24, 0
      %p135 = por %p133, %p134
      %s137 = sadd.s32 %s136, 1
      %p140 = scmp.eq.s32.totalorder %s18, 1
      %p141 = scmp.ne.s32.totalorder %s136, %s138
      %p142 = scmp.eq.s32.totalorder %s18, 0
      %p143 = por %p141, %p142
      %p144 = scmp.ne.s32.totalorder %s136, %s138
      %p145 = scmp.eq.s32.totalorder %s23, 1
      %p146 = por %p144, %p145
      %p147 = scmp.ne.s32.totalorder %s138, %s139
      %p148 = scmp.eq.s32.totalorder %s23, 0
      %p149 = por %p147, %p148
      %p150 = scmp.ne.s32.totalorder %s138, %s139
      %p151 = scmp.eq.s32.totalorder %s24, 1
      %p152 = por %p150, %p151
      %p154 = scmp.ne.s32.totalorder %s139, %s153
      %p155 = scmp.eq.s32.totalorder %s24, 0
      %p156 = por %p154, %p155
      %s158 = sadd.s32 %s157, 1
      %p161 = scmp.eq.s32.totalorder %s18, 1
      %p162 = scmp.ne.s32.totalorder %s157, %s159
      %p163 = scmp.eq.s32.totalorder %s18, 0
      %p164 = por %p162, %p163
      %p165 = scmp.ne.s32.totalorder %s157, %s159
      %p166 = scmp.eq.s32.totalorder %s23, 1
      %p167 = por %p165, %p166
      %p168 = scmp.ne.s32.totalorder %s159, %s160
      %p169 = scmp.eq.s32.totalorder %s23, 0
      %p170 = por %p168, %p169
      %p171 = scmp.ne.s32.totalorder %s159, %s160
      %p172 = scmp.eq.s32.totalorder %s24, 1
      %p173 = por %p171, %p172
      %p175 = scmp.ne.s32.totalorder %s160, %s174
      %p176 = scmp.eq.s32.totalorder %s24, 0
      %p177 = por %p175, %p176
      %s179 = sadd.s32 %s178, 1
      %p182 = scmp.eq.s32.totalorder %s18, 1
      %p183 = scmp.ne.s32.totalorder %s178, %s180
      %p184 = scmp.eq.s32.totalorder %s18, 0
      %p185 = por %p183, %p184
      %p186 = scmp.ne.s32.totalorder %s178, %s180
      %p187 = scmp.eq.s32.totalorder %s23, 1
      %p188 = por %p186, %p187
      %p189 = scmp.ne.s32.totalorder %s180, %s181
      %p190 = scmp.eq.s32.totalorder %s23, 0
      %p191 = por %p189, %p190
      %p192 = scmp.ne.s32.totalorder %s180, %s181
      %p193 = scmp.eq.s32.totalorder %s24, 1
      %p194 = por %p192, %p193
      %p196 = scmp.ne.s32.totalorder %s181, %s195
      %p197 = scmp.eq.s32.totalorder %s24, 0
      %p198 = por %p196, %p197
      %s200 = sadd.s32 %s199, 1
      %p203 = scmp.eq.s32.totalorder %s18, 1
      %p204 = scmp.ne.s32.totalorder %s199, %s201
      %p205 = scmp.eq.s32.totalorder %s18, 0
      %p206 = por %p204, %p205
      %p207 = scmp.ne.s32.totalorder %s199, %s201
      %p208 = scmp.eq.s32.totalorder %s23, 1
      %p209 = por %p207, %p208
      %p210 = scmp.ne.s32.totalorder %s201, %s202
      %p211 = scmp.eq.s32.totalorder %s23, 0
      %p212 = por %p210, %p211
      %p213 = scmp.ne.s32.totalorder %s201, %s202
      %p214 = scmp.eq.s32.totalorder %s24, 1
      %p215 = por %p213, %p214
      %p217 = scmp.ne.s32.totalorder %s202, %s216
      %p218 = scmp.eq.s32.totalorder %s24, 0
      %p219 = por %p217, %p218
      %s221 = sadd.s32 %s220, 1
      %p224 = scmp.eq.s32.totalorder %s18, 1
      %p225 = scmp.ne.s32.totalorder %s220, %s222
      %p226 = scmp.eq.s32.totalorder %s18, 0
      %p227 = por %p225, %p226
      %p228 = scmp.ne.s32.totalorder %s220, %s222
      %p229 = scmp.eq.s32.totalorder %s23, 1
      %p230 = por %p228, %p229
      %p231 = scmp.ne.s32.totalorder %s222, %s223
      %p232 = scmp.eq.s32.totalorder %s23, 0
      %p233 = por %p231, %p232
      %p234 = scmp.ne.s32.totalorder %s222, %s223
      %p235 = scmp.eq.s32.totalorder %s24, 1
      %p236 = por %p234, %p235
      %p238 = scmp.ne.s32.totalorder %s223, %s237
      %p239 = scmp.eq.s32.totalorder %s24, 0
      %p240 = por %p238, %p239
      %s241 = ssub.s32 %s18, %s25
      %p242 = scmp.eq.s32.totalorder %s241, 0
      %s244 = sadd.s32 %s243, 1
      %s245 = scalar_select %p242, %s243, %s244
      %p248 = pneg %p242
      %p249 = scmp.eq.s32.totalorder %s18, 1
      %p250 = por %p248, %p249
      %p251 = scmp.ne.s32.totalorder %s243, %s246
      %p252 = scmp.eq.s32.totalorder %s18, 0
      %p253 = por %p251, %p252
      %p254 = scmp.ne.s32.totalorder %s243, %s246
      %p255 = scmp.eq.s32.totalorder %s23, 1
      %p256 = por %p254, %p255
      %p257 = scmp.ne.s32.totalorder %s246, %s247
      %p258 = scmp.eq.s32.totalorder %s23, 0
      %p259 = por %p257, %p258
      %p260 = scmp.ne.s32.totalorder %s246, %s247
      %p261 = scmp.eq.s32.totalorder %s24, 1
      %p262 = por %p260, %p261
      %p264 = scmp.ne.s32.totalorder %s247, %s263
      %p265 = scmp.eq.s32.totalorder %s24, 0
      %p266 = por %p264, %p265
      %p267 = scmp.le.s32.totalorder 1, %s18
      %p268 = scmp.lt.s32.totalorder %s18, 3
      %p269 = pnand %p267, %p268
      %p270 = pneg %p269
      // Predicated region
      $region9: #{encoder_forward.1} parent=5 // pred_check
        _
      $region10: #{encoder_forward.1} parent=5 // pred_check_branch
        %272 = sbr.rel (%p269) target = $region12
      $region11: #{encoder_forward.1} parent=5 // pred_region
        %s273 = ssub.s32 %s18, 1
        // Predicated region
        $region13: #{encoder_forward.1} parent=11 // pred_check
          %p274 = pneg %p65
        $region14: #{encoder_forward.1} parent=11 // pred_check_branch
          %276 = sbr.rel (%p274) target = $region16
        $region15: #{encoder_forward.1} parent=11 // pred_region
          _
        $region16: #{encoder_forward.1} parent=11 // pred_fallthru
          _
        // Predicated region
        $region17: #{encoder_forward.1} parent=11 // pred_check
          %p277 = pneg %p86
        $region18: #{encoder_forward.1} parent=11 // pred_check_branch
          %279 = sbr.rel (%p277) target = $region20
        $region19: #{encoder_forward.1} parent=11 // pred_region
          _
        $region20: #{encoder_forward.1} parent=11 // pred_fallthru
          _
        // Predicated region
        $region21: #{encoder_forward.1} parent=11 // pred_check
          %p280 = pneg %p107
        $region22: #{encoder_forward.1} parent=11 // pred_check_branch
          %282 = sbr.rel (%p280) target = $region24
        $region23: #{encoder_forward.1} parent=11 // pred_region
          _
        $region24: #{encoder_forward.1} parent=11 // pred_fallthru
          _
        // Predicated region
        $region25: #{encoder_forward.1} parent=11 // pred_check
          %p283 = pneg %p128
        $region26: #{encoder_forward.1} parent=11 // pred_check_branch
          %285 = sbr.rel (%p283) target = $region28
        $region27: #{encoder_forward.1} parent=11 // pred_region
          _
        $region28: #{encoder_forward.1} parent=11 // pred_fallthru
          _
        // Predicated region
        $region29: #{encoder_forward.1} parent=11 // pred_check
          %p286 = pneg %p149
        $region30: #{encoder_forward.1} parent=11 // pred_check_branch
          %288 = sbr.rel (%p286) target = $region32
        $region31: #{encoder_forward.1} parent=11 // pred_region
          %290 = vsyncadd [#allocation3], 0
          %s291 = sshll.u32 %s5, 4
          %s292 = int_to_ptr.hbm [resolvable:$true] %s291
          %s293 = sshll.u32 [#allocation2], 4
          %s294 = int_to_ptr.vmem [resolvable:$true] %s293
          %299 = dma.hbm_to_vmem [thread:$0]  %s292, 6144, %s294, [#allocation3], 128, 128, 8
        $region32: #{encoder_forward.1} parent=11 // pred_fallthru
          _
        // Predicated region
        $region33: #{encoder_forward.1} parent=11 // pred_check
          %p300 = pneg %p170
        $region34: #{encoder_forward.1} parent=11 // pred_check_branch
          %302 = sbr.rel (%p300) target = $region36
        $region35: #{encoder_forward.1} parent=11 // pred_region
          _
        $region36: #{encoder_forward.1} parent=11 // pred_fallthru
          _
        // Predicated region
        $region37: #{encoder_forward.1} parent=11 // pred_check
          %p303 = pneg %p191
        $region38: #{encoder_forward.1} parent=11 // pred_check_branch
          %305 = sbr.rel (%p303) target = $region40
        $region39: #{encoder_forward.1} parent=11 // pred_region
          _
        $region40: #{encoder_forward.1} parent=11 // pred_fallthru
          _
        // Predicated region
        $region41: #{encoder_forward.1} parent=11 // pred_check
          %p306 = pneg %p212
        $region42: #{encoder_forward.1} parent=11 // pred_check_branch
          %308 = sbr.rel (%p306) target = $region44
        $region43: #{encoder_forward.1} parent=11 // pred_region
          %310 = vsyncadd [#allocation5], 0
          %s311 = sshll.u32 %s8, 4
          %s312 = int_to_ptr.hbm [resolvable:$true] %s311
          %s313 = sshll.u32 [#allocation4], 4
          %s314 = int_to_ptr.vmem [resolvable:$true] %s313
          %319 = dma.hbm_to_vmem [thread:$0]  %s312, 6144, %s314, [#allocation5], 128, 128, 8
        $region44: #{encoder_forward.1} parent=11 // pred_fallthru
          _
        // Predicated region
        $region45: #{encoder_forward.1} parent=11 // pred_check
          %p320 = pneg %p233
        $region46: #{encoder_forward.1} parent=11 // pred_check_branch
          %322 = sbr.rel (%p320) target = $region48
        $region47: #{encoder_forward.1} parent=11 // pred_region
          _
        $region48: #{encoder_forward.1} parent=11 // pred_fallthru
          _
      $region12: #{encoder_forward.1} parent=5 // pred_fallthru
        _
      %p323 = scmp.lt.s32.totalorder %s18, 2
      // Predicated region
      $region49: #{encoder_forward.1} parent=5 // pred_check
        %p324 = pneg %p323
      $region50: #{encoder_forward.1} parent=5 // pred_check_branch
        %326 = sbr.rel (%p324) target = $region52
      $region51: #{encoder_forward.1} parent=5 // pred_region
        // Predicated region
        $region53: #{encoder_forward.1} parent=51 // pred_check
          %p327 = pneg %p38
        $region54: #{encoder_forward.1} parent=51 // pred_check_branch
          %329 = sbr.rel (%p327) target = $region56
        $region55: #{encoder_forward.1} parent=51 // pred_region
          %p330 = scmp.lt.s32.totalorder %s18, 1
          %s331 = scalar_select %p330, %s18, 1
          %s332 = smul.addr %s331, 2
          %s333 = smul.addr %s332, 8
          %s334 = scalar_lea.vmem %s0, %s333
        $region56: #{encoder_forward.1} parent=51 // pred_fallthru
          _
      $region52: #{encoder_forward.1} parent=5 // pred_fallthru
        _
      %p335 = scmp.le.s32.totalorder 1, %s18
      %p336 = scmp.lt.s32.totalorder %s18, 3
      %p337 = pnand %p335, %p336
      %p338 = pneg %p337
      // Predicated region
      $region57: #{encoder_forward.1} parent=5 // pred_check
        _
      $region58: #{encoder_forward.1} parent=5 // pred_check_branch
        %340 = sbr.rel (%p337) target = $region60
      $region59: #{encoder_forward.1} parent=5 // pred_region
        %s341 = ssub.s32 %s18, 1
        // Predicated region
        $region61: #{encoder_forward.1} parent=59 // pred_check
          %p342 = pneg %p149
        $region62: #{encoder_forward.1} parent=59 // pred_check_branch
          %344 = sbr.rel (%p342) target = $region64
        $region63: #{encoder_forward.1} parent=59 // pred_region
          %346 = dma.done [#allocation3], 6144
        $region64: #{encoder_forward.1} parent=59 // pred_fallthru
          _
        // Predicated region
        $region65: #{encoder_forward.1} parent=59 // pred_check
          %p347 = pneg %p212
        $region66: #{encoder_forward.1} parent=59 // pred_check_branch
          %349 = sbr.rel (%p347) target = $region68
        $region67: #{encoder_forward.1} parent=59 // pred_region
          %351 = dma.done [#allocation5], 6144
        $region68: #{encoder_forward.1} parent=59 // pred_fallthru
          _
        %p352 = scmp.lt.s32.totalorder %s23, 1
        %s353 = scalar_select %p352, %s23, 1
        %s354 = smul.addr %s353, 2
        %s355 = smul.addr %s354, 8
        %s356 = scalar_lea.vmem %s0, %s355
        %p357 = pneg %p44
        %p358 = pneg %p41
        %p359 = pneg %p65
        %p360 = pneg %p62
        %p361 = pneg %p86
        %p362 = pneg %p83
        %p363 = pneg %p107
        %p364 = pneg %p104
        %p365 = pneg %p128
        %p366 = pneg %p125
        %p367 = pneg %p149
        %p368 = pneg %p146
        %p369 = pneg %p170
        %p370 = pneg %p167
        %p371 = pneg %p191
        %p372 = pneg %p188
        %p373 = pneg %p212
        %p374 = pneg %p209
        %p375 = pneg %p233
        %p376 = pneg %p230
        %p377 = pneg %p259
        %p378 = pneg %p256
        %p379 = scmp.lt.s32.totalorder %s23, 1
        %s380 = scalar_select %p379, %s23, 1
        %s381 = smul.addr %s380, 2
        %s382 = scalar_lea.vmem %s10, %s381
        %p383 = scmp.lt.s32.totalorder %s23, 1
        %s384 = scalar_select %p383, %s23, 1
        %s385 = smul.addr %s384, 2
        %s386 = smul.addr %s385, 8
        %s387 = scalar_lea.vmem %s0, %s386
        %p388 = scmp.lt.s32.totalorder %s23, 1
        %s389 = scalar_select %p388, %s23, 1
        %s390 = smul.addr %s389, 2
        %s391 = scalar_lea.vmem %s10, %s390
        %v392 = vld [vmem:[%s387] sm:$0xff]
        %v393 = vld [vmem:[%s387 + $0x8] sm:$0xff]
        %v394 = vld [vmem:[%s1] sm:$0xff]
        %vm395 = vcmask 130048
        %v397 = vsel %vm395, %v394, 0
        %399 = vmatpush.msra.mxu0 0.0
        %400 = vmatpush.msra.mxu0 0.0
        %401 = vmatpush.msra.mxu0 0.0
        %402 = vmatpush.msra.mxu0 0.0
        %403 = vmatpush.msra.mxu0 0.0
        %404 = vmatpush.msra.mxu0 0.0
        %405 = vmatpush.msra.mxu0 0.0
        %406 = vmatpush.msra.mxu0 0.0
        %407 = vmatpush.msra.mxu0 0.0
        %408 = vmatpush.msra.mxu0 0.0
        %409 = vmatpush.msra.mxu0 0.0
        %410 = vmatpush.msra.mxu0 0.0
        %411 = vmatpush.msra.mxu0 0.0
        %412 = vmatpush.msra.mxu0 0.0
        %413 = vmatpush.msra.mxu0 %v393
        %414 = vmatpush.msra.mxu0 %v392
        %415 = vmatmul.f32.gmra.mxu0 %v397
        %v416 = vpop.f32.mrf.mxu0
        %v417 = vadd.f32 0.0, %v416
        %418 = vdwg.mxu0
        %v419 = vld [vmem:[%s2] sm:$0xff]
        %v420 = vld [vmem:[%s2 + $0x8] sm:$0xff]
        %v421 = vld [vmem:[%s2 + $0x10] sm:$0xff]
        %v422 = vld [vmem:[%s2 + $0x18] sm:$0xff]
        %v423 = vld [vmem:[%s2 + $0x20] sm:$0xff]
        %v424 = vld [vmem:[%s2 + $0x28] sm:$0xff]
        %s425 = scalar_lea.vmem %s1, 8
        %v426 = vld [vmem:[%s425] sm:$0xff]
        %v428 = vsel %vm395, %v426, 0
        %430 = vmatpush.msra.mxu0 0.0
        %431 = vmatpush.msra.mxu0 0.0
        %432 = vmatpush.msra.mxu0 0.0
        %433 = vmatpush.msra.mxu0 0.0
        %434 = vmatpush.msra.mxu0 0.0
        %435 = vmatpush.msra.mxu0 0.0
        %436 = vmatpush.msra.mxu0 0.0
        %437 = vmatpush.msra.mxu0 0.0
        %438 = vmatpush.msra.mxu0 0.0
        %439 = vmatpush.msra.mxu0 0.0
        %440 = vmatpush.msra.mxu0 0.0
        %441 = vmatpush.msra.mxu0 0.0
        %442 = vmatpush.msra.mxu0 0.0
        %443 = vmatpush.msra.mxu0 0.0
        %444 = vmatpush.msra.mxu0 %v393
        %445 = vmatpush.msra.mxu0 %v392
        %446 = vmatmul.f32.gmra.mxu0 %v428
        %v447 = vpop.f32.mrf.mxu0
        %v448 = vadd.f32 0.0, %v447
        %449 = vdwg.mxu0
        %s450 = scalar_lea.vmem %s2, 48
        %v451 = vld [vmem:[%s450] sm:$0xff]
        %v452 = vld [vmem:[%s450 + $0x8] sm:$0xff]
        %v453 = vld [vmem:[%s450 + $0x10] sm:$0xff]
        %v454 = vld [vmem:[%s450 + $0x18] sm:$0xff]
        %v455 = vld [vmem:[%s450 + $0x20] sm:$0xff]
        %v456 = vld [vmem:[%s450 + $0x28] sm:$0xff]
        %vm457 = vcmask 392192
        %v459 = vsel %vm457, %v448, 0
        %461 = vmatpush.msra.mxu0 0.0
        %462 = vmatpush.msra.mxu0 0.0
        %463 = vmatpush.msra.mxu0 0.0
        %464 = vmatpush.msra.mxu0 0.0
        %465 = vmatpush.msra.mxu0 0.0
        %466 = vmatpush.msra.mxu0 0.0
        %467 = vmatpush.msra.mxu0 0.0
        %468 = vmatpush.msra.mxu0 0.0
        %469 = vmatpush.msra.mxu0 0.0
        %470 = vmatpush.msra.mxu0 0.0
        %471 = vmatpush.msra.mxu0 %v456
        %472 = vmatpush.msra.mxu0 %v455
        %473 = vmatpush.msra.mxu0 %v454
        %474 = vmatpush.msra.mxu0 %v453
        %475 = vmatpush.msra.mxu0 %v452
        %476 = vmatpush.msra.mxu0 %v451
        %477 = vmatmul.f32.gmra.mxu0 %v459
        %v478 = vpop.f32.mrf.mxu0
        %v479 = vadd.f32 0.0, %v478
        %480 = vdwg.mxu0
        %v482 = vsel %vm457, %v417, 0
        %484 = vmatpush.msra.mxu0 0.0
        %485 = vmatpush.msra.mxu0 0.0
        %486 = vmatpush.msra.mxu0 0.0
        %487 = vmatpush.msra.mxu0 0.0
        %488 = vmatpush.msra.mxu0 0.0
        %489 = vmatpush.msra.mxu0 0.0
        %490 = vmatpush.msra.mxu0 0.0
        %491 = vmatpush.msra.mxu0 0.0
        %492 = vmatpush.msra.mxu0 0.0
        %493 = vmatpush.msra.mxu0 0.0
        %494 = vmatpush.msra.mxu0 %v424
        %495 = vmatpush.msra.mxu0 %v423
        %496 = vmatpush.msra.mxu0 %v422
        %497 = vmatpush.msra.mxu0 %v421
        %498 = vmatpush.msra.mxu0 %v420
        %499 = vmatpush.msra.mxu0 %v419
        %500 = vmatmul.f32.gmra.mxu0 %v482
        %v501 = vpop.f32.mrf.mxu0
        %v502 = vadd.f32 %v479, %v501
        %503 = vdwg.mxu0
        %s504 = scalar_lea.vmem %s1, 16
        %v505 = vld [vmem:[%s504] sm:$0xff]
        %v507 = vsel %vm395, %v505, 0
        %509 = vmatpush.msra.mxu0 0.0
        %510 = vmatpush.msra.mxu0 0.0
        %511 = vmatpush.msra.mxu0 0.0
        %512 = vmatpush.msra.mxu0 0.0
        %513 = vmatpush.msra.mxu0 0.0
        %514 = vmatpush.msra.mxu0 0.0
        %515 = vmatpush.msra.mxu0 0.0
        %516 = vmatpush.msra.mxu0 0.0
        %517 = vmatpush.msra.mxu0 0.0
        %518 = vmatpush.msra.mxu0 0.0
        %519 = vmatpush.msra.mxu0 0.0
        %520 = vmatpush.msra.mxu0 0.0
        %521 = vmatpush.msra.mxu0 0.0
        %522 = vmatpush.msra.mxu0 0.0
        %523 = vmatpush.msra.mxu0 %v393
        %524 = vmatpush.msra.mxu0 %v392
        %525 = vmatmul.f32.gmra.mxu0 %v507
        %v526 = vpop.f32.mrf.mxu0
        %v527 = vadd.f32 0.0, %v526
        %528 = vdwg.mxu0
        %s529 = scalar_lea.vmem %s2, 96
        %v530 = vld [vmem:[%s529] sm:$0xff]
        %v531 = vld [vmem:[%s529 + $0x8] sm:$0xff]
        %v532 = vld [vmem:[%s529 + $0x10] sm:$0xff]
        %v533 = vld [vmem:[%s529 + $0x18] sm:$0xff]
        %v534 = vld [vmem:[%s529 + $0x20] sm:$0xff]
        %v535 = vld [vmem:[%s529 + $0x28] sm:$0xff]
        %v537 = vsel %vm457, %v527, 0
        %539 = vmatpush.msra.mxu0 0.0
        %540 = vmatpush.msra.mxu0 0.0
        %541 = vmatpush.msra.mxu0 0.0
        %542 = vmatpush.msra.mxu0 0.0
        %543 = vmatpush.msra.mxu0 0.0
        %544 = vmatpush.msra.mxu0 0.0
        %545 = vmatpush.msra.mxu0 0.0
        %546 = vmatpush.msra.mxu0 0.0
        %547 = vmatpush.msra.mxu0 0.0
        %548 = vmatpush.msra.mxu0 0.0
        %549 = vmatpush.msra.mxu0 %v535
        %550 = vmatpush.msra.mxu0 %v534
        %551 = vmatpush.msra.mxu0 %v533
        %552 = vmatpush.msra.mxu0 %v532
        %553 = vmatpush.msra.mxu0 %v531
        %554 = vmatpush.msra.mxu0 %v530
        %555 = vmatmul.f32.gmra.mxu0 %v537
        %v556 = vpop.f32.mrf.mxu0
        %v557 = vadd.f32 0.0, %v556
        %558 = vdwg.mxu0
        %v559 = vadd.f32 %v502, %v557
        %v560 = vld [vmem:[%s3] sm:$0x1]
        %v562 = vperm.slane %v560, 0
        %v564 = vadd.f32 %v559, %v562
        %v565 = vmax.f32 %v564, 0.0
        %v566 = vld [vmem:[%s4] sm:$0xf]
        %vm567 = vcmask 64512
        %v569 = vsel %vm567, %v566, 0
        %571 = vmatpush.msra.mxu0 0.0
        %572 = vmatpush.msra.mxu0 0.0
        %573 = vmatpush.msra.mxu0 0.0
        %574 = vmatpush.msra.mxu0 0.0
        %575 = vmatpush.msra.mxu0 0.0
        %576 = vmatpush.msra.mxu0 0.0
        %577 = vmatpush.msra.mxu0 0.0
        %578 = vmatpush.msra.mxu0 0.0
        %579 = vmatpush.msra.mxu0 0.0
        %580 = vmatpush.msra.mxu0 0.0
        %581 = vmatpush.msra.mxu0 0.0
        %582 = vmatpush.msra.mxu0 0.0
        %583 = vmatpush.msra.mxu0 0.0
        %584 = vmatpush.msra.mxu0 0.0
        %585 = vmatpush.msra.mxu0 0.0
        %586 = vmatpush.msra.mxu0 %v565
        %587 = vmatmul.f32.gmra.mxu0 %v569
        %v588 = vpop.f32.mrf.mxu0
        %v589 = vadd.f32 0.0, %v588
        %590 = vdwg.mxu0
        %v591 = vld [vmem:[#allocation2] sm:$0xff]
        %v592 = vld [vmem:[#allocation2 + $0x8] sm:$0xff]
        %v593 = vld [vmem:[#allocation2 + $0x10] sm:$0xff]
        %v594 = vld [vmem:[#allocation2 + $0x18] sm:$0xff]
        %v595 = vld [vmem:[#allocation2 + $0x20] sm:$0xff]
        %v596 = vld [vmem:[#allocation2 + $0x28] sm:$0xff]
        %v597 = vld [vmem:[#allocation2 + $0x30] sm:$0xff]
        %v598 = vld [vmem:[#allocation2 + $0x38] sm:$0xff]
        %v599 = vld [vmem:[#allocation2 + $0x40] sm:$0xff]
        %v600 = vld [vmem:[#allocation2 + $0x48] sm:$0xff]
        %v601 = vld [vmem:[#allocation2 + $0x50] sm:$0xff]
        %v602 = vld [vmem:[#allocation2 + $0x58] sm:$0xff]
        %v603 = vld [vmem:[#allocation2 + $0x60] sm:$0xff]
        %v604 = vld [vmem:[#allocation2 + $0x68] sm:$0xff]
        %v605 = vld [vmem:[#allocation2 + $0x70] sm:$0xff]
        %v606 = vld [vmem:[#allocation2 + $0x78] sm:$0xff]
        %s607 = scalar_lea.vmem %s4, 4
        %v608 = vld [vmem:[%s607] sm:$0xf]
        %v610 = vsel %vm567, %v608, 0
        %612 = vmatpush.msra.mxu0 0.0
        %613 = vmatpush.msra.mxu0 0.0
        %614 = vmatpush.msra.mxu0 0.0
        %615 = vmatpush.msra.mxu0 0.0
        %616 = vmatpush.msra.mxu0 0.0
        %617 = vmatpush.msra.mxu0 0.0
        %618 = vmatpush.msra.mxu0 0.0
        %619 = vmatpush.msra.mxu0 0.0
        %620 = vmatpush.msra.mxu0 0.0
        %621 = vmatpush.msra.mxu0 0.0
        %622 = vmatpush.msra.mxu0 0.0
        %623 = vmatpush.msra.mxu0 0.0
        %624 = vmatpush.msra.mxu0 0.0
        %625 = vmatpush.msra.mxu0 0.0
        %626 = vmatpush.msra.mxu0 0.0
        %627 = vmatpush.msra.mxu0 %v565
        %628 = vmatmul.f32.gmra.mxu0 %v610
        %v629 = vpop.f32.mrf.mxu0
        %v630 = vadd.f32 0.0, %v629
        %631 = vdwg.mxu0
        %s632 = scalar_lea.vmem [#allocation2], 128
        %v633 = vld [vmem:[%s632] sm:$0xff]
        %v634 = vld [vmem:[%s632 + $0x8] sm:$0xff]
        %v635 = vld [vmem:[%s632 + $0x10] sm:$0xff]
        %v636 = vld [vmem:[%s632 + $0x18] sm:$0xff]
        %v637 = vld [vmem:[%s632 + $0x20] sm:$0xff]
        %v638 = vld [vmem:[%s632 + $0x28] sm:$0xff]
        %v639 = vld [vmem:[%s632 + $0x30] sm:$0xff]
        %v640 = vld [vmem:[%s632 + $0x38] sm:$0xff]
        %v641 = vld [vmem:[%s632 + $0x40] sm:$0xff]
        %v642 = vld [vmem:[%s632 + $0x48] sm:$0xff]
        %v643 = vld [vmem:[%s632 + $0x50] sm:$0xff]
        %v644 = vld [vmem:[%s632 + $0x58] sm:$0xff]
        %v645 = vld [vmem:[%s632 + $0x60] sm:$0xff]
        %v646 = vld [vmem:[%s632 + $0x68] sm:$0xff]
        %v647 = vld [vmem:[%s632 + $0x70] sm:$0xff]
        %v648 = vld [vmem:[%s632 + $0x78] sm:$0xff]
        %649 = vmatpush.msra.mxu0 %v648
        %650 = vmatpush.msra.mxu0 %v647
        %651 = vmatpush.msra.mxu0 %v646
        %652 = vmatpush.msra.mxu0 %v645
        %653 = vmatpush.msra.mxu0 %v644
        %654 = vmatpush.msra.mxu0 %v643
        %655 = vmatpush.msra.mxu0 %v642
        %656 = vmatpush.msra.mxu0 %v641
        %657 = vmatpush.msra.mxu0 %v640
        %658 = vmatpush.msra.mxu0 %v639
        %659 = vmatpush.msra.mxu0 %v638
        %660 = vmatpush.msra.mxu0 %v637
        %661 = vmatpush.msra.mxu0 %v636
        %662 = vmatpush.msra.mxu0 %v635
        %663 = vmatpush.msra.mxu0 %v634
        %664 = vmatpush.msra.mxu0 %v633
        %665 = vmatmul.f32.gmra.mxu0 %v630
        %v666 = vpop.f32.mrf.mxu0
        %v667 = vadd.f32 0.0, %v666
        %668 = vdwg.mxu0
        %669 = vmatpush.msra.mxu0 %v606
        %670 = vmatpush.msra.mxu0 %v605
        %671 = vmatpush.msra.mxu0 %v604
        %672 = vmatpush.msra.mxu0 %v603
        %673 = vmatpush.msra.mxu0 %v602
        %674 = vmatpush.msra.mxu0 %v601
        %675 = vmatpush.msra.mxu0 %v600
        %676 = vmatpush.msra.mxu0 %v599
        %677 = vmatpush.msra.mxu0 %v598
        %678 = vmatpush.msra.mxu0 %v597
        %679 = vmatpush.msra.mxu0 %v596
        %680 = vmatpush.msra.mxu0 %v595
        %681 = vmatpush.msra.mxu0 %v594
        %682 = vmatpush.msra.mxu0 %v593
        %683 = vmatpush.msra.mxu0 %v592
        %684 = vmatpush.msra.mxu0 %v591
        %685 = vmatmul.f32.gmra.mxu0 %v589
        %v686 = vpop.f32.mrf.mxu0
        %v687 = vadd.f32 %v667, %v686
        %688 = vdwg.mxu0
        %s689 = scalar_lea.vmem %s4, 8
        %v690 = vld [vmem:[%s689] sm:$0xf]
        %v692 = vsel %vm567, %v690, 0
        %694 = vmatpush.msra.mxu0 0.0
        %695 = vmatpush.msra.mxu0 0.0
        %696 = vmatpush.msra.mxu0 0.0
        %697 = vmatpush.msra.mxu0 0.0
        %698 = vmatpush.msra.mxu0 0.0
        %699 = vmatpush.msra.mxu0 0.0
        %700 = vmatpush.msra.mxu0 0.0
        %701 = vmatpush.msra.mxu0 0.0
        %702 = vmatpush.msra.mxu0 0.0
        %703 = vmatpush.msra.mxu0 0.0
        %704 = vmatpush.msra.mxu0 0.0
        %705 = vmatpush.msra.mxu0 0.0
        %706 = vmatpush.msra.mxu0 0.0
        %707 = vmatpush.msra.mxu0 0.0
        %708 = vmatpush.msra.mxu0 0.0
        %709 = vmatpush.msra.mxu0 %v565
        %710 = vmatmul.f32.gmra.mxu0 %v692
        %v711 = vpop.f32.mrf.mxu0
        %v712 = vadd.f32 0.0, %v711
        %713 = vdwg.mxu0
        %s714 = scalar_lea.vmem [#allocation2], 256
        %v715 = vld [vmem:[%s714] sm:$0xff]
        %v716 = vld [vmem:[%s714 + $0x8] sm:$0xff]
        %v717 = vld [vmem:[%s714 + $0x10] sm:$0xff]
        %v718 = vld [vmem:[%s714 + $0x18] sm:$0xff]
        %v719 = vld [vmem:[%s714 + $0x20] sm:$0xff]
        %v720 = vld [vmem:[%s714 + $0x28] sm:$0xff]
        %v721 = vld [vmem:[%s714 + $0x30] sm:$0xff]
        %v722 = vld [vmem:[%s714 + $0x38] sm:$0xff]
        %v723 = vld [vmem:[%s714 + $0x40] sm:$0xff]
        %v724 = vld [vmem:[%s714 + $0x48] sm:$0xff]
        %v725 = vld [vmem:[%s714 + $0x50] sm:$0xff]
        %v726 = vld [vmem:[%s714 + $0x58] sm:$0xff]
        %v727 = vld [vmem:[%s714 + $0x60] sm:$0xff]
        %v728 = vld [vmem:[%s714 + $0x68] sm:$0xff]
        %v729 = vld [vmem:[%s714 + $0x70] sm:$0xff]
        %v730 = vld [vmem:[%s714 + $0x78] sm:$0xff]
        %731 = vmatpush.msra.mxu0 %v730
        %732 = vmatpush.msra.mxu0 %v729
        %733 = vmatpush.msra.mxu0 %v728
        %734 = vmatpush.msra.mxu0 %v727
        %735 = vmatpush.msra.mxu0 %v726
        %736 = vmatpush.msra.mxu0 %v725
        %737 = vmatpush.msra.mxu0 %v724
        %738 = vmatpush.msra.mxu0 %v723
        %739 = vmatpush.msra.mxu0 %v722
        %740 = vmatpush.msra.mxu0 %v721
        %741 = vmatpush.msra.mxu0 %v720
        %742 = vmatpush.msra.mxu0 %v719
        %743 = vmatpush.msra.mxu0 %v718
        %744 = vmatpush.msra.mxu0 %v717
        %745 = vmatpush.msra.mxu0 %v716
        %746 = vmatpush.msra.mxu0 %v715
        %747 = vmatmul.f32.gmra.mxu0 %v712
        %v748 = vpop.f32.mrf.mxu0
        %v749 = vadd.f32 0.0, %v748
        %750 = vdwg.mxu0
        %v751 = vadd.f32 %v687, %v749
        %v752 = vld [vmem:[%s6] sm:$0x1]
        %v754 = vperm.slane %v752, 0
        %v756 = vadd.f32 %v751, %v754
        %v757 = vmax.f32 %v756, 0.0
        %v758 = vld [vmem:[%s7] sm:$0x3]
        %vm759 = vcmask 31744
        %v761 = vsel %vm759, %v758, 0
        %vm763 = vcmask 1043456
        %v765 = vsel %vm763, %v757, 0
        %767 = vmatpush.msra.mxu0 0.0
        %768 = vmatpush.msra.mxu0 0.0
        %769 = vmatpush.msra.mxu0 0.0
        %770 = vmatpush.msra.mxu0 0.0
        %771 = vmatpush.msra.mxu0 0.0
        %772 = vmatpush.msra.mxu0 0.0
        %773 = vmatpush.msra.mxu0 0.0
        %774 = vmatpush.msra.mxu0 0.0
        %775 = vmatpush.msra.mxu0 0.0
        %776 = vmatpush.msra.mxu0 0.0
        %777 = vmatpush.msra.mxu0 0.0
        %778 = vmatpush.msra.mxu0 0.0
        %779 = vmatpush.msra.mxu0 0.0
        %780 = vmatpush.msra.mxu0 0.0
        %781 = vmatpush.msra.mxu0 0.0
        %782 = vmatpush.msra.mxu0 %v765
        %783 = vmatmul.f32.gmra.mxu0 %v761
        %v784 = vpop.f32.mrf.mxu0
        %v785 = vadd.f32 0.0, %v784
        %786 = vdwg.mxu0
        %v787 = vld [vmem:[#allocation4] sm:$0xff]
        %v788 = vld [vmem:[#allocation4 + $0x8] sm:$0xff]
        %v789 = vld [vmem:[#allocation4 + $0x10] sm:$0xff]
        %v790 = vld [vmem:[#allocation4 + $0x18] sm:$0xff]
        %v791 = vld [vmem:[#allocation4 + $0x20] sm:$0xff]
        %v792 = vld [vmem:[#allocation4 + $0x28] sm:$0xff]
        %v793 = vld [vmem:[#allocation4 + $0x30] sm:$0xff]
        %v794 = vld [vmem:[#allocation4 + $0x38] sm:$0xff]
        %v795 = vld [vmem:[#allocation4 + $0x40] sm:$0xff]
        %v796 = vld [vmem:[#allocation4 + $0x48] sm:$0xff]
        %v797 = vld [vmem:[#allocation4 + $0x50] sm:$0xff]
        %v798 = vld [vmem:[#allocation4 + $0x58] sm:$0xff]
        %v799 = vld [vmem:[#allocation4 + $0x60] sm:$0xff]
        %v800 = vld [vmem:[#allocation4 + $0x68] sm:$0xff]
        %v801 = vld [vmem:[#allocation4 + $0x70] sm:$0xff]
        %v802 = vld [vmem:[#allocation4 + $0x78] sm:$0xff]
        %s803 = scalar_lea.vmem %s7, 2
        %v804 = vld [vmem:[%s803] sm:$0x3]
        %v806 = vsel %vm759, %v804, 0
        %808 = vmatpush.msra.mxu0 0.0
        %809 = vmatpush.msra.mxu0 0.0
        %810 = vmatpush.msra.mxu0 0.0
        %811 = vmatpush.msra.mxu0 0.0
        %812 = vmatpush.msra.mxu0 0.0
        %813 = vmatpush.msra.mxu0 0.0
        %814 = vmatpush.msra.mxu0 0.0
        %815 = vmatpush.msra.mxu0 0.0
        %816 = vmatpush.msra.mxu0 0.0
        %817 = vmatpush.msra.mxu0 0.0
        %818 = vmatpush.msra.mxu0 0.0
        %819 = vmatpush.msra.mxu0 0.0
        %820 = vmatpush.msra.mxu0 0.0
        %821 = vmatpush.msra.mxu0 0.0
        %822 = vmatpush.msra.mxu0 0.0
        %823 = vmatpush.msra.mxu0 %v765
        %824 = vmatmul.f32.gmra.mxu0 %v806
        %v825 = vpop.f32.mrf.mxu0
        %v826 = vadd.f32 0.0, %v825
        %827 = vdwg.mxu0
        %s828 = scalar_lea.vmem [#allocation4], 128
        %v829 = vld [vmem:[%s828] sm:$0xff]
        %v830 = vld [vmem:[%s828 + $0x8] sm:$0xff]
        %v831 = vld [vmem:[%s828 + $0x10] sm:$0xff]
        %v832 = vld [vmem:[%s828 + $0x18] sm:$0xff]
        %v833 = vld [vmem:[%s828 + $0x20] sm:$0xff]
        %v834 = vld [vmem:[%s828 + $0x28] sm:$0xff]
        %v835 = vld [vmem:[%s828 + $0x30] sm:$0xff]
        %v836 = vld [vmem:[%s828 + $0x38] sm:$0xff]
        %v837 = vld [vmem:[%s828 + $0x40] sm:$0xff]
        %v838 = vld [vmem:[%s828 + $0x48] sm:$0xff]
        %v839 = vld [vmem:[%s828 + $0x50] sm:$0xff]
        %v840 = vld [vmem:[%s828 + $0x58] sm:$0xff]
        %v841 = vld [vmem:[%s828 + $0x60] sm:$0xff]
        %v842 = vld [vmem:[%s828 + $0x68] sm:$0xff]
        %v843 = vld [vmem:[%s828 + $0x70] sm:$0xff]
        %v844 = vld [vmem:[%s828 + $0x78] sm:$0xff]
        %845 = vmatpush.msra.mxu0 %v844
        %846 = vmatpush.msra.mxu0 %v843
        %847 = vmatpush.msra.mxu0 %v842
        %848 = vmatpush.msra.mxu0 %v841
        %849 = vmatpush.msra.mxu0 %v840
        %850 = vmatpush.msra.mxu0 %v839
        %851 = vmatpush.msra.mxu0 %v838
        %852 = vmatpush.msra.mxu0 %v837
        %853 = vmatpush.msra.mxu0 %v836
        %854 = vmatpush.msra.mxu0 %v835
        %855 = vmatpush.msra.mxu0 %v834
        %856 = vmatpush.msra.mxu0 %v833
        %857 = vmatpush.msra.mxu0 %v832
        %858 = vmatpush.msra.mxu0 %v831
        %859 = vmatpush.msra.mxu0 %v830
        %860 = vmatpush.msra.mxu0 %v829
        %861 = vmatmul.f32.gmra.mxu0 %v826
        %v862 = vpop.f32.mrf.mxu0
        %v863 = vadd.f32 0.0, %v862
        %864 = vdwg.mxu0
        %865 = vmatpush.msra.mxu0 %v802
        %866 = vmatpush.msra.mxu0 %v801
        %867 = vmatpush.msra.mxu0 %v800
        %868 = vmatpush.msra.mxu0 %v799
        %869 = vmatpush.msra.mxu0 %v798
        %870 = vmatpush.msra.mxu0 %v797
        %871 = vmatpush.msra.mxu0 %v796
        %872 = vmatpush.msra.mxu0 %v795
        %873 = vmatpush.msra.mxu0 %v794
        %874 = vmatpush.msra.mxu0 %v793
        %875 = vmatpush.msra.mxu0 %v792
        %876 = vmatpush.msra.mxu0 %v791
        %877 = vmatpush.msra.mxu0 %v790
        %878 = vmatpush.msra.mxu0 %v789
        %879 = vmatpush.msra.mxu0 %v788
        %880 = vmatpush.msra.mxu0 %v787
        %881 = vmatmul.f32.gmra.mxu0 %v785
        %v882 = vpop.f32.mrf.mxu0
        %v883 = vadd.f32 %v863, %v882
        %884 = vdwg.mxu0
        %s885 = scalar_lea.vmem %s7, 4
        %v886 = vld [vmem:[%s885] sm:$0x3]
        %v888 = vsel %vm759, %v886, 0
        %890 = vmatpush.msra.mxu0 0.0
        %891 = vmatpush.msra.mxu0 0.0
        %892 = vmatpush.msra.mxu0 0.0
        %893 = vmatpush.msra.mxu0 0.0
        %894 = vmatpush.msra.mxu0 0.0
        %895 = vmatpush.msra.mxu0 0.0
        %896 = vmatpush.msra.mxu0 0.0
        %897 = vmatpush.msra.mxu0 0.0
        %898 = vmatpush.msra.mxu0 0.0
        %899 = vmatpush.msra.mxu0 0.0
        %900 = vmatpush.msra.mxu0 0.0
        %901 = vmatpush.msra.mxu0 0.0
        %902 = vmatpush.msra.mxu0 0.0
        %903 = vmatpush.msra.mxu0 0.0
        %904 = vmatpush.msra.mxu0 0.0
        %905 = vmatpush.msra.mxu0 %v765
        %906 = vmatmul.f32.gmra.mxu0 %v888
        %v907 = vpop.f32.mrf.mxu0
        %v908 = vadd.f32 0.0, %v907
        %909 = vdwg.mxu0
        %s910 = scalar_lea.vmem [#allocation4], 256
        %v911 = vld [vmem:[%s910] sm:$0xff]
        %v912 = vld [vmem:[%s910 + $0x8] sm:$0xff]
        %v913 = vld [vmem:[%s910 + $0x10] sm:$0xff]
        %v914 = vld [vmem:[%s910 + $0x18] sm:$0xff]
        %v915 = vld [vmem:[%s910 + $0x20] sm:$0xff]
        %v916 = vld [vmem:[%s910 + $0x28] sm:$0xff]
        %v917 = vld [vmem:[%s910 + $0x30] sm:$0xff]
        %v918 = vld [vmem:[%s910 + $0x38] sm:$0xff]
        %v919 = vld [vmem:[%s910 + $0x40] sm:$0xff]
        %v920 = vld [vmem:[%s910 + $0x48] sm:$0xff]
        %v921 = vld [vmem:[%s910 + $0x50] sm:$0xff]
        %v922 = vld [vmem:[%s910 + $0x58] sm:$0xff]
        %v923 = vld [vmem:[%s910 + $0x60] sm:$0xff]
        %v924 = vld [vmem:[%s910 + $0x68] sm:$0xff]
        %v925 = vld [vmem:[%s910 + $0x70] sm:$0xff]
        %v926 = vld [vmem:[%s910 + $0x78] sm:$0xff]
        %927 = vmatpush.msra.mxu0 %v926
        %928 = vmatpush.msra.mxu0 %v925
        %929 = vmatpush.msra.mxu0 %v924
        %930 = vmatpush.msra.mxu0 %v923
        %931 = vmatpush.msra.mxu0 %v922
        %932 = vmatpush.msra.mxu0 %v921
        %933 = vmatpush.msra.mxu0 %v920
        %934 = vmatpush.msra.mxu0 %v919
        %935 = vmatpush.msra.mxu0 %v918
        %936 = vmatpush.msra.mxu0 %v917
        %937 = vmatpush.msra.mxu0 %v916
        %938 = vmatpush.msra.mxu0 %v915
        %939 = vmatpush.msra.mxu0 %v914
        %940 = vmatpush.msra.mxu0 %v913
        %941 = vmatpush.msra.mxu0 %v912
        %942 = vmatpush.msra.mxu0 %v911
        %943 = vmatmul.f32.gmra.mxu0 %v908
        %v944 = vpop.f32.mrf.mxu0
        %v945 = vadd.f32 0.0, %v944
        %946 = vdwg.mxu0
        %v947 = vadd.f32 %v883, %v945
        %v948 = vld [vmem:[%s9] sm:$0x1]
        %v950 = vperm.slane %v948, 0
        %v952 = vadd.f32 %v947, %v950
        %v953 = vmax.f32 %v952, 0.0
        %954 = vst [vmem:[%s391] sm:$0x3] %v953
        %p955 = scmp.lt.s32.totalorder %s23, 1
        %s956 = scalar_select %p955, %s23, 1
        %s957 = smul.addr %s956, 2
        %s958 = scalar_lea.vmem %s10, %s957
        // Predicated region
        $region69: #{encoder_forward.1} parent=59 // pred_check
          %p959 = pneg %p256
        $region70: #{encoder_forward.1} parent=59 // pred_check_branch
          %961 = sbr.rel (%p959) target = $region72
        $region71: #{encoder_forward.1} parent=59 // pred_region
          _
        $region72: #{encoder_forward.1} parent=59 // pred_fallthru
          _
      $region60: #{encoder_forward.1} parent=5 // pred_fallthru
        _
      %p962 = scmp.le.s32.totalorder 2, %s18
      // Predicated region
      $region73: #{encoder_forward.1} parent=5 // pred_check
        %p963 = pneg %p962
      $region74: #{encoder_forward.1} parent=5 // pred_check_branch
        %965 = sbr.rel (%p963) target = $region76
      $region75: #{encoder_forward.1} parent=5 // pred_region
        %s966 = ssub.s32 %s18, 2
        // Predicated region
        $region77: #{encoder_forward.1} parent=75 // pred_check
          %p967 = pneg %p262
        $region78: #{encoder_forward.1} parent=75 // pred_check_branch
          %969 = sbr.rel (%p967) target = $region80
        $region79: #{encoder_forward.1} parent=75 // pred_region
          %p970 = scmp.lt.s32.totalorder %s24, 1
          %s971 = scalar_select %p970, %s24, 1
          %s972 = smul.addr %s971, 2
          %s973 = scalar_lea.vmem %s10, %s972
        $region80: #{encoder_forward.1} parent=75 // pred_fallthru
          _
      $region76: #{encoder_forward.1} parent=5 // pred_fallthru
        _
    $region6: #{encoder_forward.1} parent=1 // loop_footer
      %s22 = sadd.s32 1, %s18
    $region7: #{encoder_forward.1} parent=1 // loop_footer_branch
      %17 = sbr.rel target = $region3
    $region8: #{encoder_forward.1} parent=1 // loop_exit
      _
    %974 = vsyncpa [#allocation3], 1
    %s975 = scalar_lea.sflag [#allocation3], 1
    %976 = vsyncpa %s975, 1
    %977 = vsyncpa [#allocation5], 1

</llo_original>
